<compile_context>
chip_gen: v5e
topology: v5e:2x2
jax: 0.10.0
libtpu: 0.0.40
codegen_flags: <defaults>
</compile_context>

<pallas_src>
import functools

import jax
import jax.numpy as jnp
from jax.experimental import pallas as pl
from jax.experimental.pallas import tpu as pltpu


LANE = 128


def _round_up(x, m):
    return (x + m - 1) // m * m


def _pick_tile(n_pad):
    for t in (512, 256, 128):
        if n_pad % t == 0:
            return t
    return 128


def _vmem_limit_bytes():
    """Generation-aware scoped-VMEM limit (fallback if the query is absent)."""
    try:
        info = pltpu.get_tpu_info()
        cap = getattr(info, "vmem_capacity_bytes", None)
        if cap:
            return int(min(cap * 3 // 4, 100 * 1024 * 1024))
    except Exception:
        pass
    return 64 * 1024 * 1024


# ----------------------------- Pallas kernel ------------------------------- #

def fused_lightgcn_kernel(x0_ref, wt_ref, bt_ref, at_ref, out_ref,
                          xw_ref, xcur_ref, acc_ref,
                          *, tile_n, num_tiles, inv_layers_p1):
    """One grid step = one (layer, node-column-tile) of the propagation.

    x0_ref  : [D, Np]            f32  initial embeddings X0^T (resident)
    wt_ref  : [1, D, D]          bf16 W_l^T for the current layer
    bt_ref  : [1, D, 1]          f32  b_l^T for the current layer
    at_ref  : [Np, tile_n]       bf16 streamed column strip of A_norm^T
    out_ref : [D, tile_n]        f32  layer-mean output tile
    xw_ref  : [J, D, tile_n]     bf16 scratch: (X_l W_l)^T, tile-major
    xcur_ref: [J, D, tile_n]     bf16 scratch: X_{l+1}^T (feeds next layer)
    acc_ref : [J, D, tile_n]     f32  scratch: running sum x0 + x1 + ... + x_l
    """
    l = pl.program_id(0)          # layer (outer, sequential carry)
    j = pl.program_id(1)          # output node-column tile (inner)
    d = xw_ref.shape[1]

    # ---- per-layer prologue: compute (X_l W_l)^T once, on the first tile ---
    @pl.when(j == 0)
    def _prologue():
        @pl.when(l == 0)
        def _first_layer():
            for k in range(num_tiles):                 # static unroll
                sl = slice(k * tile_n, (k + 1) * tile_n)
                x0k = x0_ref[:, sl]                    # [D, tile_n] f32
                acc_ref[k] = x0k                       # seed running sum
                xw_ref[k] = jnp.dot(
                    wt_ref[0], x0k.astype(jnp.bfloat16),
                    preferred_element_type=jnp.float32).astype(jnp.bfloat16)

        @pl.when(l > 0)
        def _later_layer():
            for k in range(num_tiles):                 # static unroll
                xw_ref[k] = jnp.dot(
                    wt_ref[0], xcur_ref[k],
                    preferred_element_type=jnp.float32).astype(jnp.bfloat16)

    # ---- aggregate this node tile: (X W)^T @ A^T[:, tile] + b^T ------------
    # K (= all nodes) is chunked in static tile_n pieces so every slice of the
    # streamed A^T strip and of the xw scratch is static / leading-axis only.
    tile = jnp.zeros((d, tile_n), dtype=jnp.float32)
    for k in range(num_tiles):
        sl = slice(k * tile_n, (k + 1) * tile_n)
        tile += jnp.dot(xw_ref[k], at_ref[sl, :],
                        preferred_element_type=jnp.float32)
    tile += bt_ref[0]                                  # [D, 1] lane-broadcast

    new_acc = acc_ref[j] + tile                        # x0 + ... + x_{l+1}
    acc_ref[j] = new_acc
    xcur_ref[j] = tile.astype(jnp.bfloat16)            # next layer's X (bf16)

    # Always-defined write; only the last layer's value survives in HBM.
    out_ref[...] = new_acc * inv_layers_p1


def lightgcn_propagate(x0_t, w_t_stack, b_t_stack, a_t, num_layers, tile_n):
    d, n_pad = x0_t.shape
    num_tiles = n_pad // tile_n

    kernel = functools.partial(
        fused_lightgcn_kernel, tile_n=tile_n, num_tiles=num_tiles,
        inv_layers_p1=1.0 / (num_layers + 1))

    a_index_map = lambda l, j: (0, j)
    try:
        # Explicit double-buffering on the only large streamed operand.
        a_spec = pl.BlockSpec((n_pad, tile_n), a_index_map,
                              pipeline_mode=pl.Buffered(2))
    except Exception:
        a_spec = pl.BlockSpec((n_pad, tile_n), a_index_map)

    return pl.pallas_call(
        kernel,
        out_shape=jax.ShapeDtypeStruct((d, n_pad), jnp.float32),
        grid_spec=pltpu.PrefetchScalarGridSpec(
            num_scalar_prefetch=0,
            grid=(num_layers, num_tiles),
            in_specs=[
                pl.BlockSpec((d, n_pad), lambda l, j: (0, 0)),     # X0^T resident
                pl.BlockSpec((1, d, d), lambda l, j: (l, 0, 0)),   # W_l^T
                pl.BlockSpec((1, d, 1), lambda l, j: (l, 0, 0)),   # b_l^T
                a_spec,                                            # A^T strip
            ],
            out_specs=pl.BlockSpec((d, tile_n), lambda l, j: (0, j)),
            scratch_shapes=[
                pltpu.VMEM((num_tiles, d, tile_n), jnp.bfloat16),  # (XW)^T
                pltpu.VMEM((num_tiles, d, tile_n), jnp.bfloat16),  # X_{l+1}^T
                pltpu.VMEM((num_tiles, d, tile_n), jnp.float32),   # layer sum
            ]),
        compiler_params=pltpu.CompilerParams(
            # TODO(synk): core-parallel variant for v7x (scratch deps force
            # "arbitrary" on the tile axis in this fused-layer design).
            dimension_semantics=("arbitrary", "arbitrary"),
            vmem_limit_bytes=_vmem_limit_bytes()),
    )(x0_t, w_t_stack, b_t_stack, a_t)


# ------------------------------- JAX glue ---------------------------------- #

def xavier_uniform(key, shape):
    fan_in, fan_out = shape[0], shape[1]
    bound = (6.0 / (fan_in + fan_out)) ** 0.5
    return jax.random.uniform(key, shape, jnp.float32, -bound, bound)


def build_norm_adj_t(edge_index, num_nodes, n_pad, dtype=jnp.bfloat16):
    """Transposed GCN-normalized adjacency (A_norm^T) with self-loops.

    Built directly in the padded [Np, Np] shape; the D^-1/2 scaling is fused
    with the bf16 cast (single O(N^2) temporary).  Padded rows/cols are zero,
    so padded nodes can never leak into valid outputs.
    """
    src, dst = edge_index[0], edge_index[1]
    loop = jnp.arange(num_nodes, dtype=edge_index.dtype)
    src = jnp.concatenate([src, loop])
    dst = jnp.concatenate([dst, loop])
    # Dense A has A[dst, src] += 1; build A^T directly: A^T[src, dst] += 1.
    at = jnp.zeros((n_pad, n_pad), jnp.float32).at[src, dst].add(1.0)
    deg = at.sum(axis=0)                       # row sums of A (per dst node)
    dinv = jnp.where(deg > 0.0, jax.lax.rsqrt(jnp.maximum(deg, 1.0)), 0.0)
    # A_norm^T[s, d] = dinv[s] * A^T[s, d] * dinv[d]
    return (dinv[:, None] * at * dinv[None, :]).astype(dtype)


def init_params(key, num_users, num_items, num_attr1, num_attr2,
                embedding_dim=32, num_layers=3):
    keys = jax.random.split(key, 4 + num_layers)
    return {
        "user_embedding": xavier_uniform(keys[0], (num_users, embedding_dim)),
        "item_embedding": xavier_uniform(keys[1], (num_items, embedding_dim)),
        "item_attr1": xavier_uniform(keys[2], (num_attr1, embedding_dim)),
        "item_attr2": xavier_uniform(keys[3], (num_attr2, embedding_dim)),
        "gcn_w": [xavier_uniform(keys[4 + l], (embedding_dim, embedding_dim))
                  for l in range(num_layers)],
        "gcn_b": [jnp.zeros((embedding_dim,), jnp.float32)
                  for _ in range(num_layers)],
    }


def lightgcn_forward(params, user_idx, item_idx, attr1_idx, attr2_idx,
                     edge_index, num_layers=3):
    user_emb = params["user_embedding"][user_idx]
    item_emb = params["item_embedding"][item_idx]
    attr1_emb = params["item_attr1"][attr1_idx]
    attr2_emb = params["item_attr2"][attr2_idx]
    all_emb = jnp.concatenate([user_emb, item_emb, attr1_emb, attr2_emb], axis=0)
    num_nodes, emb_dim = all_emb.shape

    # Transposed layout: node dim on lanes (padded to 128), D=32 unpadded.
    n_pad = _round_up(max(num_nodes, 1), LANE)
    tile_n = _pick_tile(n_pad)

    x0_t = jnp.pad(all_emb.T, ((0, 0), (0, n_pad - num_nodes)))
    a_t = build_norm_adj_t(edge_index, num_nodes, n_pad)

    w_t_stack = jnp.stack([params["gcn_w"][l].T
                           for l in range(num_layers)]).astype(jnp.bfloat16)
    b_t_stack = jnp.stack([params["gcn_b"][l][:, None]
                           for l in range(num_layers)]).astype(jnp.float32)

    out_t = lightgcn_propagate(x0_t, w_t_stack, b_t_stack, a_t,
                               num_layers, tile_n)
    final_emb = out_t[:, :num_nodes].T

    # Tiny gather + dot-product score stays in plain jnp (XLA fuses it).
    user_final = final_emb[user_idx]
    item_final = final_emb[item_idx + user_idx.shape[0]]
    return jnp.sum(user_final * item_final, axis=1)


# --------------------------------- main ------------------------------------ #

if __name__ == "__main__":
    num_users, num_items, num_attr1, num_attr2 = 16, 12, 6, 5
    embedding_dim, num_layers = 32, 3
    batch = 8  # each index vector -> N = 4 * batch = 32 graph nodes

    root = jax.random.PRNGKey(0)
    k_param, k_u, k_i, k_a1, k_a2, k_e = jax.random.split(root, 6)

    params = init_params(k_param, num_users, num_items, num_attr1, num_attr2,
                         embedding_dim, num_layers)

    user_idx = jax.random.randint(k_u, (batch,), 0, num_users, jnp.int32)
    item_idx = jax.random.randint(k_i, (batch,), 0, num_items, jnp.int32)
    attr1_idx = jax.random.randint(k_a1, (batch,), 0, num_attr1, jnp.int32)
    attr2_idx = jax.random.randint(k_a2, (batch,), 0, num_attr2, jnp.int32)

    num_nodes = 4 * batch
    num_edges = 64
    edge_index = jax.random.randint(k_e, (2, num_edges), 0, num_nodes, jnp.int32)

    scores = lightgcn_forward(params, user_idx, item_idx, attr1_idx, attr2_idx,
                              edge_index, num_layers=num_layers)
    jax.block_until_ready(scores)

    assert scores.shape == (batch,) and scores.dtype == jnp.float32
    assert bool(jnp.all(jnp.isfinite(scores)))
    print("KERNEL_OK")
</pallas_src>

<mosaic_0001>
module attributes {stable_mosaic.version = 11 : i64} {
  func.func @fused_lightgcn_kernel(%arg0: i32, %arg1: i32, %arg2: memref<32x128xf32, #tpu.memory_space<vmem>>, %arg3: memref<1x32x32xbf16, #tpu.memory_space<vmem>>, %arg4: memref<1x32x1xf32, #tpu.memory_space<vmem>>, %arg5: memref<128x128xbf16, #tpu.memory_space<vmem>>, %arg6: memref<32x128xf32, #tpu.memory_space<vmem>>, %arg7: memref<1x32x128xbf16, #tpu.memory_space<vmem>>, %arg8: memref<1x32x128xbf16, #tpu.memory_space<vmem>>, %arg9: memref<1x32x128xf32, #tpu.memory_space<vmem>>) attributes {dimension_semantics = [#tpu.dimension_semantics<arbitrary>, #tpu.dimension_semantics<arbitrary>], iteration_bounds = array<i64: 3, 1>, scalar_prefetch = 0 : i64, scratch_operands = 3 : i64, tpu.core_type = #tpu.core_type<tc>, window_params = [{pipeline_mode = #tpu.pipeline_mode<synchronous>, transform_indices = @transform_0, window_bounds = array<i64: 32, 128>}, {transform_indices = @transform_1, window_bounds = array<i64: 1, 32, 32>}, {transform_indices = @transform_2, window_bounds = array<i64: 1, 32, 1>}, {pipeline_mode = #tpu.pipeline_mode<double_buffered>, transform_indices = @transform_3, window_bounds = array<i64: 128, 128>}, {transform_indices = @transform_4, window_bounds = array<i64: 32, 128>}]} {
    %c0_i32 = arith.constant 0 : i32
    %0 = arith.cmpi eq, %arg1, %c0_i32 : i32
    %1 = arith.extui %0 : i1 to i32
    %c0_i32_0 = arith.constant 0 : i32
    %2 = arith.cmpi ne, %1, %c0_i32_0 : i32
    scf.if %2 {
      %c0_i32_18 = arith.constant 0 : i32
      %29 = arith.cmpi eq, %arg0, %c0_i32_18 : i32
      %30 = arith.extui %29 : i1 to i32
      %c0_i32_19 = arith.constant 0 : i32
      %31 = arith.cmpi ne, %30, %c0_i32_19 : i32
      scf.if %31 {
        %c0_22 = arith.constant 0 : index
        %c0_23 = arith.constant 0 : index
        %35 = vector.load %arg2[%c0_22, %c0_23] : memref<32x128xf32, #tpu.memory_space<vmem>>, vector<32x128xf32>
        %c0_24 = arith.constant 0 : index
        %c0_25 = arith.constant 0 : index
        %c0_26 = arith.constant 0 : index
        %36 = vector.load %arg9[%c0_24, %c0_25, %c0_26] : memref<1x32x128xf32, #tpu.memory_space<vmem>>, vector<1x32x128xf32>
        %37 = vector.shape_cast %36 : vector<1x32x128xf32> to vector<32x128xf32>
        %38 = vector.shape_cast %35 : vector<32x128xf32> to vector<1x32x128xf32>
        tpu.vector_store %arg9[%c0_24, %c0_25, %c0_26], %38 {strides = array<i32>} : memref<1x32x128xf32, #tpu.memory_space<vmem>>, vector<1x32x128xf32>,
        %c0_27 = arith.constant 0 : index
        %c0_28 = arith.constant 0 : index
        %c0_29 = arith.constant 0 : index
        %39 = vector.load %arg3[%c0_27, %c0_28, %c0_29] : memref<1x32x32xbf16, #tpu.memory_space<vmem>>, vector<1x32x32xbf16>
        %40 = vector.shape_cast %39 : vector<1x32x32xbf16> to vector<32x32xbf16>
        %41 = arith.truncf %35 : vector<32x128xf32> to vector<32x128xbf16>
        %cst_30 = arith.constant dense<0.000000e+00> : vector<32x128xf32>
        %42 = tpu.matmul %40, %41, %cst_30 {dimension_numbers = #tpu.dot_dimension_numbers<[1], [0], [0], [1], [0, 0, 1, 1], [], []>} : vector<32x32xbf16>, vector<32x128xbf16>, vector<32x128xf32> -> vector<32x128xf32>
        %43 = arith.truncf %42 : vector<32x128xf32> to vector<32x128xbf16>
        %c0_31 = arith.constant 0 : index
        %c0_32 = arith.constant 0 : index
        %c0_33 = arith.constant 0 : index
        %44 = vector.load %arg7[%c0_31, %c0_32, %c0_33] : memref<1x32x128xbf16, #tpu.memory_space<vmem>>, vector<1x32x128xbf16>
        %45 = vector.shape_cast %44 : vector<1x32x128xbf16> to vector<32x128xbf16>
        %46 = vector.shape_cast %43 : vector<32x128xbf16> to vector<1x32x128xbf16>
        tpu.vector_store %arg7[%c0_31, %c0_32, %c0_33], %46 {strides = array<i32>} : memref<1x32x128xbf16, #tpu.memory_space<vmem>>, vector<1x32x128xbf16>,
      } else {
      }
      %c0_i32_20 = arith.constant 0 : i32
      %32 = arith.cmpi sgt, %arg0, %c0_i32_20 : i32
      %33 = arith.extui %32 : i1 to i32
      %c0_i32_21 = arith.constant 0 : i32
      %34 = arith.cmpi ne, %33, %c0_i32_21 : i32
      scf.if %34 {
        %c0_22 = arith.constant 0 : index
        %c0_23 = arith.constant 0 : index
        %c0_24 = arith.constant 0 : index
        %35 = vector.load %arg3[%c0_22, %c0_23, %c0_24] : memref<1x32x32xbf16, #tpu.memory_space<vmem>>, vector<1x32x32xbf16>
        %36 = vector.shape_cast %35 : vector<1x32x32xbf16> to vector<32x32xbf16>
        %c0_25 = arith.constant 0 : index
        %c0_26 = arith.constant 0 : index
        %c0_27 = arith.constant 0 : index
        %37 = vector.load %arg8[%c0_25, %c0_26, %c0_27] : memref<1x32x128xbf16, #tpu.memory_space<vmem>>, vector<1x32x128xbf16>
        %38 = vector.shape_cast %37 : vector<1x32x128xbf16> to vector<32x128xbf16>
        %cst_28 = arith.constant dense<0.000000e+00> : vector<32x128xf32>
        %39 = tpu.matmul %36, %38, %cst_28 {dimension_numbers = #tpu.dot_dimension_numbers<[1], [0], [0], [1], [0, 0, 1, 1], [], []>} : vector<32x32xbf16>, vector<32x128xbf16>, vector<32x128xf32> -> vector<32x128xf32>
        %40 = arith.truncf %39 : vector<32x128xf32> to vector<32x128xbf16>
        %c0_29 = arith.constant 0 : index
        %c0_30 = arith.constant 0 : index
        %c0_31 = arith.constant 0 : index
        %41 = vector.load %arg7[%c0_29, %c0_30, %c0_31] : memref<1x32x128xbf16, #tpu.memory_space<vmem>>, vector<1x32x128xbf16>
        %42 = vector.shape_cast %41 : vector<1x32x128xbf16> to vector<32x128xbf16>
        %43 = vector.shape_cast %40 : vector<32x128xbf16> to vector<1x32x128xbf16>
        tpu.vector_store %arg7[%c0_29, %c0_30, %c0_31], %43 {strides = array<i32>} : memref<1x32x128xbf16, #tpu.memory_space<vmem>>, vector<1x32x128xbf16>,
      } else {
      }
    } else {
    }
    %cst = arith.constant 0.000000e+00 : f32
    %3 = vector.broadcast %cst : f32 to vector<32x128xf32>
    %c0 = arith.constant 0 : index
    %c0_1 = arith.constant 0 : index
    %c0_2 = arith.constant 0 : index
    %4 = vector.load %arg7[%c0, %c0_1, %c0_2] : memref<1x32x128xbf16, #tpu.memory_space<vmem>>, vector<1x32x128xbf16>
    %5 = vector.shape_cast %4 : vector<1x32x128xbf16> to vector<32x128xbf16>
    %c0_3 = arith.constant 0 : index
    %c0_4 = arith.constant 0 : index
    %6 = vector.load %arg5[%c0_3, %c0_4] : memref<128x128xbf16, #tpu.memory_space<vmem>>, vector<128x128xbf16>
    %cst_5 = arith.constant dense<0.000000e+00> : vector<32x128xf32>
    %7 = tpu.matmul %5, %6, %cst_5 {dimension_numbers = #tpu.dot_dimension_numbers<[1], [0], [0], [1], [0, 0, 1, 1], [], []>} : vector<32x128xbf16>, vector<128x128xbf16>, vector<32x128xf32> -> vector<32x128xf32>
    %8 = arith.addf %3, %7 : vector<32x128xf32>
    %c0_6 = arith.constant 0 : index
    %c0_7 = arith.constant 0 : index
    %c0_8 = arith.constant 0 : index
    %9 = vector.load %arg4[%c0_6, %c0_7, %c0_8] : memref<1x32x1xf32, #tpu.memory_space<vmem>>, vector<1x32x1xf32>
    %10 = vector.shape_cast %9 : vector<1x32x1xf32> to vector<32x1xf32>
    %11 = vector.broadcast %10 : vector<32x1xf32> to vector<32x128xf32>
    %12 = arith.addf %8, %11 : vector<32x128xf32>
    %13 = arith.index_cast %arg1 : i32 to index
    %c0_9 = arith.constant 0 : index
    %c0_10 = arith.constant 0 : index
    %14 = vector.load %arg9[%13, %c0_9, %c0_10] : memref<1x32x128xf32, #tpu.memory_space<vmem>>, vector<1x32x128xf32>
    %15 = vector.shape_cast %14 : vector<1x32x128xf32> to vector<32x128xf32>
    %16 = arith.addf %15, %12 : vector<32x128xf32>
    %17 = arith.index_cast %arg1 : i32 to index
    %c0_11 = arith.constant 0 : index
    %c0_12 = arith.constant 0 : index
    %18 = vector.load %arg9[%17, %c0_11, %c0_12] : memref<1x32x128xf32, #tpu.memory_space<vmem>>, vector<1x32x128xf32>
    %19 = vector.shape_cast %18 : vector<1x32x128xf32> to vector<32x128xf32>
    %20 = vector.shape_cast %16 : vector<32x128xf32> to vector<1x32x128xf32>
    tpu.vector_store %arg9[%17, %c0_11, %c0_12], %20 {strides = array<i32>} : memref<1x32x128xf32, #tpu.memory_space<vmem>>, vector<1x32x128xf32>,
    %21 = arith.truncf %12 : vector<32x128xf32> to vector<32x128xbf16>
    %22 = arith.index_cast %arg1 : i32 to index
    %c0_13 = arith.constant 0 : index
    %c0_14 = arith.constant 0 : index
    %23 = vector.load %arg8[%22, %c0_13, %c0_14] : memref<1x32x128xbf16, #tpu.memory_space<vmem>>, vector<1x32x128xbf16>
    %24 = vector.shape_cast %23 : vector<1x32x128xbf16> to vector<32x128xbf16>
    %25 = vector.shape_cast %21 : vector<32x128xbf16> to vector<1x32x128xbf16>
    tpu.vector_store %arg8[%22, %c0_13, %c0_14], %25 {strides = array<i32>} : memref<1x32x128xbf16, #tpu.memory_space<vmem>>, vector<1x32x128xbf16>,
    %cst_15 = arith.constant 2.500000e-01 : f32
    %26 = vector.broadcast %cst_15 : f32 to vector<32x128xf32>
    %27 = arith.mulf %16, %26 : vector<32x128xf32>
    %c0_16 = arith.constant 0 : index
    %c0_17 = arith.constant 0 : index
    %28 = vector.load %arg6[%c0_16, %c0_17] : memref<32x128xf32, #tpu.memory_space<vmem>>, vector<32x128xf32>
    tpu.vector_store %arg6[%c0_16, %c0_17], %27 {strides = array<i32>} : memref<32x128xf32, #tpu.memory_space<vmem>>, vector<32x128xf32>,
    return
  }
  func.func @transform_0(%arg0: i32, %arg1: i32) -> (i32, i32) {
    %c0_i32 = arith.constant 0 : i32
    %c0_i32_0 = arith.constant 0 : i32
    %c0_i32_1 = arith.constant 0 : i32
    return %c0_i32, %c0_i32_0 : i32, i32
  }
  func.func @transform_1(%arg0: i32, %arg1: i32) -> (i32, i32, i32) {
    %c0_i32 = arith.constant 0 : i32
    %c0_i32_0 = arith.constant 0 : i32
    %c0_i32_1 = arith.constant 0 : i32
    return %arg0, %c0_i32, %c0_i32_0 : i32, i32, i32
  }
  func.func @transform_2(%arg0: i32, %arg1: i32) -> (i32, i32, i32) {
    %c0_i32 = arith.constant 0 : i32
    %c0_i32_0 = arith.constant 0 : i32
    %c0_i32_1 = arith.constant 0 : i32
    return %arg0, %c0_i32, %c0_i32_0 : i32, i32, i32
  }
  func.func @transform_3(%arg0: i32, %arg1: i32) -> (i32, i32) {
    %c0_i32 = arith.constant 0 : i32
    %c0_i32_0 = arith.constant 0 : i32
    return %c0_i32, %arg1 : i32, i32
  }
  func.func @transform_4(%arg0: i32, %arg1: i32) -> (i32, i32) {
    %c0_i32 = arith.constant 0 : i32
    %c0_i32_0 = arith.constant 0 : i32
    return %c0_i32, %arg1 : i32, i32
  }
}

</mosaic_0001>

<llo_original>
// kernel: tpu_custom_call.1
$region0: #{tpu_custom_call.1}
  #allocation0 [shape = 'u32[]', space=smem, size = 0x4, offset = 0x4, fixed_abs, tag = 'smem constant byte address 0x4 - core index']
  #allocation1 [shape = 'u32[72,128]{1,0:T(1,128)}', space=vmem, size = 0x9000, scoped, tag = 'internal scratch']
  #allocation2 [shape = 'bf16[1,32,128]{2,1,0:T(8,128)(2,1)}', space=vmem, size = 0x2000, scoped, tag = 'scratch operand']
  #allocation3 [shape = 'bf16[1,32,128]{2,1,0:T(8,128)(2,1)}', space=vmem, size = 0x2000, scoped, tag = 'scratch operand']
  #allocation4 [shape = 'f32[1,32,128]{2,1,0:T(8,128)}', space=vmem, size = 0x4000, scoped, tag = 'scratch operand']
  %s0 = inlined_call_operand.vmem [shape: f32[32,128], index: 0, kind: input, shape index: {}]
  %s1 = inlined_call_operand.hbm [shape: bf16[3,32,32], index: 1, kind: input, shape index: {}]
  %s2 = inlined_call_operand.vmem [shape: f32[3,32,1], index: 2, kind: input, shape index: {}]
  %s3 = inlined_call_operand.vmem [shape: bf16[128,128], index: 3, kind: input, shape index: {}]
  %s4 = inlined_call_operand.hbm [shape: f32[32,128], index: 4, kind: output, shape index: {}]
  %s5 = sld [smem:[#allocation0]]
  $region65: #{tpu_custom_call.1} parent=0
    _
  %s7 = ssub.s32 1, %s5
  %s8 = scalar_select 0, %s7, %s5
  $region1: #{tpu_custom_call.1} parent=0
    #allocation5 [shape = 'u8[16384]{0}', space=vmem, size = 0x4000, scoped, tag = 'input window, operand 1']
    #allocation6 [shape = 's32[2]{0}', space=sflag, size = 0x8, scoped, tag = 'scoped memory for tpu_custom_call.1']
    #allocation7 [shape = 's32[2]{0}', space=sflag, size = 0x8, scoped, tag = 'scoped memory for tpu_custom_call.1']
    #allocation8 [shape = 'u8[16384]{0}', space=vmem, size = 0x4000, scoped, tag = 'output window, operand 0, single buffered']
    %9 = vsyncpa [#allocation6], 0
    %s10 = scalar_lea.sflag [#allocation6], 1
    %11 = vsyncpa %s10, 0
    %12 = vsyncpa [#allocation7], 0
    loop: start=0, step=1, limit=5
    $region2: #{tpu_custom_call.1} parent=1 // loop_pre_header
      _
    $region3: #{tpu_custom_call.1} parent=1 // loop_header
      %s14 = sphi 0, %s18
      %p15 = scmp.ge.s32.totalorder %s14, 5
      %s21 = sphi 0, %s33
      %s22 = sphi 0, %s29
      %s23 = sphi 0, %s21
      %s24 = sphi 0, %s22
      %s25 = sphi 0, %s23
      %s26 = sphi 0, %s24
      %s34 = sphi 0, %s34
      %s36 = sphi 0, %s34
      %s37 = sphi 0, %s36
      %s51 = sphi 0, %s37
      %s57 = sphi 0, %s59
      %s60 = sphi 0, %s57
      %s61 = sphi 0, %s60
      %s77 = sphi 0, %s61
      %s83 = sphi 0, %s85
      %s86 = sphi 0, %s83
      %s87 = sphi 0, %s86
      %s103 = sphi 0, %s87
      %s109 = sphi 0, %s111
      %s112 = sphi 0, %s109
      %s113 = sphi 0, %s112
      %s129 = sphi 0, %s113
      %s135 = sphi 0, %s137
      %s138 = sphi 0, %s135
      %s139 = sphi 0, %s138
      %s155 = sphi 0, %s139
    $region4: #{tpu_custom_call.1} parent=1 // loop_header_branch
      %17 = sbr.rel (%p15) target = $region8
    $region5: #{tpu_custom_call.1} parent=1 // loop_body
      %s19 = ssub.s32 %s14, 1
      %s20 = ssub.s32 %s14, 2
      %s27 = sadd.s32 1, %s22
      %p28 = scmp.ge.s32.totalorder %s27, 1
      %s29 = scalar_select %p28, 0, %s27
      %s30 = sadd.s32 1, %s21
      %s31 = scalar_select %p28, %s30, %s21
      %p32 = scmp.ge.s32.totalorder %s31, 3
      %s33 = scalar_select %p32, 0, %s31
      %s35 = sadd.s32 %s34, 1
      %p38 = scmp.eq.s32.totalorder %s14, 2
      %p39 = scmp.ne.s32.totalorder %s34, %s36
      %p40 = scmp.eq.s32.totalorder %s14, 0
      %p41 = por %p39, %p40
      %p42 = scmp.ne.s32.totalorder %s34, %s36
      %p43 = scmp.eq.s32.totalorder %s19, 2
      %p44 = por %p42, %p43
      %p45 = scmp.ne.s32.totalorder %s36, %s37
      %p46 = scmp.eq.s32.totalorder %s19, 0
      %p47 = por %p45, %p46
      %p48 = scmp.ne.s32.totalorder %s36, %s37
      %p49 = scmp.eq.s32.totalorder %s20, 2
      %p50 = por %p48, %p49
      %p52 = scmp.ne.s32.totalorder %s37, %s51
      %p53 = scmp.eq.s32.totalorder %s20, 0
      %p54 = por %p52, %p53
      %s55 = ssub.s32 %s21, %s33
      %p56 = scmp.eq.s32.totalorder %s55, 0
      %s58 = sadd.s32 %s57, 1
      %s59 = scalar_select %p56, %s57, %s58
      %p62 = pneg %p56
      %p63 = scmp.eq.s32.totalorder %s14, 2
      %p64 = por %p62, %p63
      %p65 = scmp.ne.s32.totalorder %s57, %s60
      %p66 = scmp.eq.s32.totalorder %s14, 0
      %p67 = por %p65, %p66
      %p68 = scmp.ne.s32.totalorder %s57, %s60
      %p69 = scmp.eq.s32.totalorder %s19, 2
      %p70 = por %p68, %p69
      %p71 = scmp.ne.s32.totalorder %s60, %s61
      %p72 = scmp.eq.s32.totalorder %s19, 0
      %p73 = por %p71, %p72
      %p74 = scmp.ne.s32.totalorder %s60, %s61
      %p75 = scmp.eq.s32.totalorder %s20, 2
      %p76 = por %p74, %p75
      %p78 = scmp.ne.s32.totalorder %s61, %s77
      %p79 = scmp.eq.s32.totalorder %s20, 0
      %p80 = por %p78, %p79
      %s81 = ssub.s32 %s21, %s33
      %p82 = scmp.eq.s32.totalorder %s81, 0
      %s84 = sadd.s32 %s83, 1
      %s85 = scalar_select %p82, %s83, %s84
      %p88 = pneg %p82
      %p89 = scmp.eq.s32.totalorder %s14, 2
      %p90 = por %p88, %p89
      %p91 = scmp.ne.s32.totalorder %s83, %s86
      %p92 = scmp.eq.s32.totalorder %s14, 0
      %p93 = por %p91, %p92
      %p94 = scmp.ne.s32.totalorder %s83, %s86
      %p95 = scmp.eq.s32.totalorder %s19, 2
      %p96 = por %p94, %p95
      %p97 = scmp.ne.s32.totalorder %s86, %s87
      %p98 = scmp.eq.s32.totalorder %s19, 0
      %p99 = por %p97, %p98
      %p100 = scmp.ne.s32.totalorder %s86, %s87
      %p101 = scmp.eq.s32.totalorder %s20, 2
      %p102 = por %p100, %p101
      %p104 = scmp.ne.s32.totalorder %s87, %s103
      %p105 = scmp.eq.s32.totalorder %s20, 0
      %p106 = por %p104, %p105
      %s107 = ssub.s32 %s22, %s29
      %p108 = scmp.eq.s32.totalorder %s107, 0
      %s110 = sadd.s32 %s109, 1
      %s111 = scalar_select %p108, %s109, %s110
      %p114 = pneg %p108
      %p115 = scmp.eq.s32.totalorder %s14, 2
      %p116 = por %p114, %p115
      %p117 = scmp.ne.s32.totalorder %s109, %s112
      %p118 = scmp.eq.s32.totalorder %s14, 0
      %p119 = por %p117, %p118
      %p120 = scmp.ne.s32.totalorder %s109, %s112
      %p121 = scmp.eq.s32.totalorder %s19, 2
      %p122 = por %p120, %p121
      %p123 = scmp.ne.s32.totalorder %s112, %s113
      %p124 = scmp.eq.s32.totalorder %s19, 0
      %p125 = por %p123, %p124
      %p126 = scmp.ne.s32.totalorder %s112, %s113
      %p127 = scmp.eq.s32.totalorder %s20, 2
      %p128 = por %p126, %p127
      %p130 = scmp.ne.s32.totalorder %s113, %s129
      %p131 = scmp.eq.s32.totalorder %s20, 0
      %p132 = por %p130, %p131
      %s133 = ssub.s32 %s22, %s29
      %p134 = scmp.eq.s32.totalorder %s133, 0
      %s136 = sadd.s32 %s135, 1
      %s137 = scalar_select %p134, %s135, %s136
      %p140 = pneg %p134
      %p141 = scmp.eq.s32.totalorder %s14, 2
      %p142 = por %p140, %p141
      %p143 = scmp.ne.s32.totalorder %s135, %s138
      %p144 = scmp.eq.s32.totalorder %s14, 0
      %p145 = por %p143, %p144
      %p146 = scmp.ne.s32.totalorder %s135, %s138
      %p147 = scmp.eq.s32.totalorder %s19, 2
      %p148 = por %p146, %p147
      %p149 = scmp.ne.s32.totalorder %s138, %s139
      %p150 = scmp.eq.s32.totalorder %s19, 0
      %p151 = por %p149, %p150
      %p152 = scmp.ne.s32.totalorder %s138, %s139
      %p153 = scmp.eq.s32.totalorder %s20, 2
      %p154 = por %p152, %p153
      %p156 = scmp.ne.s32.totalorder %s139, %s155
      %p157 = scmp.eq.s32.totalorder %s20, 0
      %p158 = por %p156, %p157
      %p159 = scmp.le.s32.totalorder 1, %s14
      %p160 = scmp.lt.s32.totalorder %s14, 4
      %p161 = pnand %p159, %p160
      %p162 = pneg %p161
      // Predicated region
      $region9: #{tpu_custom_call.1} parent=5 // pred_check
        _
      $region10: #{tpu_custom_call.1} parent=5 // pred_check_branch
        %164 = sbr.rel (%p161) target = $region12
      $region11: #{tpu_custom_call.1} parent=5 // pred_region
        %s165 = ssub.s32 %s14, 1
        // Predicated region
        $region13: #{tpu_custom_call.1} parent=11 // pred_check
          %p166 = pneg %p47
        $region14: #{tpu_custom_call.1} parent=11 // pred_check_branch
          %168 = sbr.rel (%p166) target = $region16
        $region15: #{tpu_custom_call.1} parent=11 // pred_region
          _
        $region16: #{tpu_custom_call.1} parent=11 // pred_fallthru
          _
        // Predicated region
        $region17: #{tpu_custom_call.1} parent=11 // pred_check
          %p169 = pneg %p125
        $region18: #{tpu_custom_call.1} parent=11 // pred_check_branch
          %171 = sbr.rel (%p169) target = $region20
        $region19: #{tpu_custom_call.1} parent=11 // pred_region
          %p172 = scmp.lt.s32.totalorder %s24, 0
          %s173 = scalar_select %p172, %s24, 0
          %s174 = smul.addr %s173, 4
          %s175 = scalar_lea.vmem %s3, %s174
        $region20: #{tpu_custom_call.1} parent=11 // pred_fallthru
          _
      $region12: #{tpu_custom_call.1} parent=5 // pred_fallthru
        _
      %p176 = scmp.lt.s32.totalorder %s14, 3
      // Predicated region
      $region21: #{tpu_custom_call.1} parent=5 // pred_check
        %p177 = pneg %p176
      $region22: #{tpu_custom_call.1} parent=5 // pred_check_branch
        %179 = sbr.rel (%p177) target = $region24
      $region23: #{tpu_custom_call.1} parent=5 // pred_region
        // Predicated region
        $region25: #{tpu_custom_call.1} parent=23 // pred_check
          %p180 = pneg %p67
        $region26: #{tpu_custom_call.1} parent=23 // pred_check_branch
          %182 = sbr.rel (%p180) target = $region28
        $region27: #{tpu_custom_call.1} parent=23 // pred_region
          %s183 = sand.u32 %s57, 1
          %s184 = scalar_lea.sflag [#allocation6], %s183
          %s185 = sand.u32 %s57, 1
          %s186 = smul.addr %s185, 16
          %s187 = scalar_lea.vmem [#allocation5], %s186
          %189 = vsyncadd %s184, 0
          %s190 = smul.addr %s21, 4
          %s191 = smul.addr %s190, 4
          %s192 = scalar_lea.hbm %s1, %s191
          %s193 = sshll.u32 %s192, 4
          %s194 = int_to_ptr.hbm [resolvable:$true] %s193
          %s195 = sshll.u32 %s187, 4
          %s196 = int_to_ptr.vmem [resolvable:$true] %s195
          %201 = dma.hbm_to_vmem [thread:$0]  %s194, 256, %s196, %s184, 64, 64, 4
        $region28: #{tpu_custom_call.1} parent=23 // pred_fallthru
          _
        // Predicated region
        $region29: #{tpu_custom_call.1} parent=23 // pred_check
          %p202 = pneg %p93
        $region30: #{tpu_custom_call.1} parent=23 // pred_check_branch
          %204 = sbr.rel (%p202) target = $region32
        $region31: #{tpu_custom_call.1} parent=23 // pred_region
          %p205 = scmp.lt.s32.totalorder %s21, 2
          %s206 = scalar_select %p205, %s21, 2
          %s207 = smul.addr %s206, 4
          %s208 = smul.addr %s207, 8
          %s209 = scalar_lea.vmem %s2, %s208
        $region32: #{tpu_custom_call.1} parent=23 // pred_fallthru
          _
      $region24: #{tpu_custom_call.1} parent=5 // pred_fallthru
        _
      %p210 = scmp.le.s32.totalorder 1, %s14
      %p211 = scmp.lt.s32.totalorder %s14, 4
      %p212 = pnand %p210, %p211
      %p213 = pneg %p212
      // Predicated region
      $region33: #{tpu_custom_call.1} parent=5 // pred_check
        _
      $region34: #{tpu_custom_call.1} parent=5 // pred_check_branch
        %215 = sbr.rel (%p212) target = $region36
      $region35: #{tpu_custom_call.1} parent=5 // pred_region
        %s216 = ssub.s32 %s14, 1
        %s217 = sand.u32 %s60, 1
        %s218 = scalar_lea.sflag [#allocation6], %s217
        %s219 = sand.u32 %s60, 1
        %s220 = smul.addr %s219, 16
        %s221 = scalar_lea.vmem [#allocation5], %s220
        // Predicated region
        $region37: #{tpu_custom_call.1} parent=35 // pred_check
          %p222 = pneg %p73
        $region38: #{tpu_custom_call.1} parent=35 // pred_check_branch
          %224 = sbr.rel (%p222) target = $region40
        $region39: #{tpu_custom_call.1} parent=35 // pred_region
          %226 = dma.done %s218, 256
        $region40: #{tpu_custom_call.1} parent=35 // pred_fallthru
          _
        %p227 = pneg %p47
        %p228 = pneg %p44
        %s229 = sand.u32 %s60, 1
        %s230 = scalar_lea.sflag [#allocation6], %s229
        %s231 = sand.u32 %s60, 1
        %s232 = smul.addr %s231, 16
        %s233 = scalar_lea.vmem [#allocation5], %s232
        %p234 = pneg %p73
        %p235 = pneg %p70
        %p236 = scmp.lt.s32.totalorder %s23, 2
        %s237 = scalar_select %p236, %s23, 2
        %s238 = smul.addr %s237, 4
        %s239 = smul.addr %s238, 8
        %s240 = scalar_lea.vmem %s2, %s239
        %p241 = pneg %p99
        %p242 = pneg %p96
        %p243 = scmp.lt.s32.totalorder %s24, 0
        %s244 = scalar_select %p243, %s24, 0
        %s245 = smul.addr %s244, 4
        %s246 = scalar_lea.vmem %s3, %s245
        %p247 = pneg %p125
        %p248 = pneg %p122
        %p249 = pneg %p151
        %p250 = pneg %p148
        %p251 = scmp.lt.s32.totalorder %s23, 2
        %s252 = scalar_select %p251, %s23, 2
        %s253 = smul.addr %s252, 4
        %s254 = smul.addr %s253, 8
        %s255 = scalar_lea.vmem %s2, %s254
        %p256 = scmp.lt.s32.totalorder %s24, 0
        %s257 = scalar_select %p256, %s24, 0
        %s258 = smul.addr %s257, 4
        %s259 = scalar_lea.vmem %s3, %s258
        %p261 = scmp.eq.s32.totalorder %s24, 0
        // Predicated region
        $region41: #{tpu_custom_call.1} parent=35 // pred_check
          %p262 = pneg %p261
        $region42: #{tpu_custom_call.1} parent=35 // pred_check_branch
          %264 = sbr.rel (%p262) target = $region44
        $region43: #{tpu_custom_call.1} parent=35 // pred_region
          %p265 = scmp.eq.s32.totalorder %s23, 0
          // Predicated region
          $region45: #{tpu_custom_call.1} parent=43 // pred_check
            %p266 = pneg %p265
          $region46: #{tpu_custom_call.1} parent=43 // pred_check_branch
            %268 = sbr.rel (%p266) target = $region48
          $region47: #{tpu_custom_call.1} parent=43 // pred_region
            %v269 = vld [vmem:[%s0] sm:$0xff]
            %v270 = vld [vmem:[%s0 + $0x8] sm:$0xff]
            %v271 = vld [vmem:[%s0 + $0x10] sm:$0xff]
            %v272 = vld [vmem:[%s0 + $0x18] sm:$0xff]
            %273 = vst [vmem:[#allocation4] sm:$0xff] %v269
            %274 = vst [vmem:[#allocation4 + $0x8] sm:$0xff] %v270
            %275 = vst [vmem:[#allocation4 + $0x10] sm:$0xff] %v271
            %276 = vst [vmem:[#allocation4 + $0x18] sm:$0xff] %v272
            %v277 = vld [vmem:[%s221] sm:$0xf]
            %v278 = vld [vmem:[%s221 + $0x4] sm:$0xf]
            %v279 = vld [vmem:[%s221 + $0x8] sm:$0xf]
            %v280 = vld [vmem:[%s221 + $0xc] sm:$0xf]
            %v281 = vpack.c.bf16 %v270, %v269
            %v282 = vpack.c.bf16 %v272, %v271
            %v287 = vunpack.c.l.b16 %v277
            %v288 = vunpack.c.l.b16 %v278
            %v289 = vunpack.c.l.b16 %v279
            %v290 = vunpack.c.l.b16 %v280
            %v291 = vpack.c.b16 %v288, %v287
            %v292 = vpack.c.b16 %v290, %v289
            %vm293 = vcmask 261120
            %v295 = vsel %vm293, %v291, 0
            %v298 = vsel %vm293, %v292, 0
            %300 = vmatpush.bf16.msra.mxu0 0
            %301 = vmatpush.bf16.msra.mxu0 0
            %302 = vmatpush.bf16.msra.mxu0 0
            %303 = vmatpush.bf16.msra.mxu0 0
            %304 = vmatpush.bf16.msra.mxu0 0
            %305 = vmatpush.bf16.msra.mxu0 0
            %306 = vmatpush.bf16.msra.mxu0 %v282
            %307 = vmatpush.bf16.msra.mxu0 %v281
            %308 = vmatmul.bf16.gmra.mxu0 %v295
            %v309 = vpop.f32.mrf.mxu0
            %v310 = vadd.f32 0.0, %v309
            %v311 = vpop.f32.mrf.mxu0
            %v312 = vadd.f32 0.0, %v311
            %313 = vmatmul.bf16.gmra.mxu0 %v298
            %v314 = vpop.f32.mrf.mxu0
            %v315 = vadd.f32 0.0, %v314
            %v316 = vpop.f32.mrf.mxu0
            %v317 = vadd.f32 0.0, %v316
            %318 = vdwg.mxu0
            %v319 = vpack.c.bf16 %v310, %v310
            %v320 = vpack.c.bf16 %v312, %v312
            %v321 = vpack.c.bf16 %v315, %v315
            %v322 = vpack.c.bf16 %v317, %v317
            %323 = vst [vmem:[#allocation2] sm:$0xf] %v319
            %324 = vst [vmem:[#allocation2 + $0x4] sm:$0xf] %v320
            %325 = vst [vmem:[#allocation2 + $0x8] sm:$0xf] %v321
            %326 = vst [vmem:[#allocation2 + $0xc] sm:$0xf] %v322
          $region48: #{tpu_custom_call.1} parent=43 // pred_fallthru
            _
          %p327 = scmp.gt.s32.totalorder %s23, 0
          // Predicated region
          $region49: #{tpu_custom_call.1} parent=43 // pred_check
            %p328 = pneg %p327
          $region50: #{tpu_custom_call.1} parent=43 // pred_check_branch
            %330 = sbr.rel (%p328) target = $region52
          $region51: #{tpu_custom_call.1} parent=43 // pred_region
            %v331 = vld [vmem:[%s221] sm:$0xf]
            %v332 = vld [vmem:[%s221 + $0x4] sm:$0xf]
            %v333 = vld [vmem:[%s221 + $0x8] sm:$0xf]
            %v334 = vld [vmem:[%s221 + $0xc] sm:$0xf]
            %v335 = vld [vmem:[#allocation3] sm:$0xf]
            %v336 = vld [vmem:[#allocation3 + $0x4] sm:$0xf]
            %v337 = vld [vmem:[#allocation3 + $0x8] sm:$0xf]
            %v338 = vld [vmem:[#allocation3 + $0xc] sm:$0xf]
            %v343 = vunpack.c.l.b16 %v331
            %v344 = vunpack.c.l.b16 %v332
            %v345 = vunpack.c.l.b16 %v333
            %v346 = vunpack.c.l.b16 %v334
            %v347 = vpack.c.b16 %v344, %v343
            %v348 = vpack.c.b16 %v346, %v345
            %v353 = vunpack.c.l.b16 %v335
            %v354 = vunpack.c.l.b16 %v336
            %v355 = vunpack.c.l.b16 %v337
            %v356 = vunpack.c.l.b16 %v338
            %v357 = vpack.c.b16 %v354, %v353
            %v358 = vpack.c.b16 %v356, %v355
            %vm361 = vcmask 261120
            %v363 = vsel %vm361, %v347, 0
            %v366 = vsel %vm361, %v348, 0
            %368 = vmatpush.bf16.msra.mxu0 0
            %369 = vmatpush.bf16.msra.mxu0 0
            %370 = vmatpush.bf16.msra.mxu0 0
            %371 = vmatpush.bf16.msra.mxu0 0
            %372 = vmatpush.bf16.msra.mxu0 0
            %373 = vmatpush.bf16.msra.mxu0 0
            %374 = vmatpush.bf16.msra.mxu0 %v358
            %375 = vmatpush.bf16.msra.mxu0 %v357
            %376 = vmatmul.bf16.gmra.mxu0 %v363
            %v377 = vpop.f32.mrf.mxu0
            %v378 = vadd.f32 0.0, %v377
            %v379 = vpop.f32.mrf.mxu0
            %v380 = vadd.f32 0.0, %v379
            %381 = vmatmul.bf16.gmra.mxu0 %v366
            %v382 = vpop.f32.mrf.mxu0
            %v383 = vadd.f32 0.0, %v382
            %v384 = vpop.f32.mrf.mxu0
            %v385 = vadd.f32 0.0, %v384
            %386 = vdwg.mxu0
            %v387 = vpack.c.bf16 %v378, %v378
            %v388 = vpack.c.bf16 %v380, %v380
            %v389 = vpack.c.bf16 %v383, %v383
            %v390 = vpack.c.bf16 %v385, %v385
            %391 = vst [vmem:[#allocation2] sm:$0xf] %v387
            %392 = vst [vmem:[#allocation2 + $0x4] sm:$0xf] %v388
            %393 = vst [vmem:[#allocation2 + $0x8] sm:$0xf] %v389
            %394 = vst [vmem:[#allocation2 + $0xc] sm:$0xf] %v390
          $region52: #{tpu_custom_call.1} parent=43 // pred_fallthru
            _
        $region44: #{tpu_custom_call.1} parent=35 // pred_fallthru
          _
        %v395 = vld [vmem:[#allocation2] sm:$0xf]
        %v396 = vld [vmem:[#allocation2 + $0x4] sm:$0xf]
        %v397 = vld [vmem:[#allocation2 + $0x8] sm:$0xf]
        %v398 = vld [vmem:[#allocation2 + $0xc] sm:$0xf]
        %v399 = vld [vmem:[%s259] sm:$0xf]
        %v400 = vld [vmem:[%s259 + $0x4] sm:$0xf]
        %v401 = vld [vmem:[%s259 + $0x8] sm:$0xf]
        %v402 = vld [vmem:[%s259 + $0xc] sm:$0xf]
        %v403 = vld [vmem:[%s259 + $0x10] sm:$0xf]
        %v404 = vld [vmem:[%s259 + $0x14] sm:$0xf]
        %v405 = vld [vmem:[%s259 + $0x18] sm:$0xf]
        %v406 = vld [vmem:[%s259 + $0x1c] sm:$0xf]
        %v407 = vld [vmem:[%s259 + $0x20] sm:$0xf]
        %v408 = vld [vmem:[%s259 + $0x24] sm:$0xf]
        %v409 = vld [vmem:[%s259 + $0x28] sm:$0xf]
        %v410 = vld [vmem:[%s259 + $0x2c] sm:$0xf]
        %v411 = vld [vmem:[%s259 + $0x30] sm:$0xf]
        %v412 = vld [vmem:[%s259 + $0x34] sm:$0xf]
        %v413 = vld [vmem:[%s259 + $0x38] sm:$0xf]
        %v414 = vld [vmem:[%s259 + $0x3c] sm:$0xf]
        %v415 = vld [vmem:[%s255] sm:$0xff]
        %v416 = vld [vmem:[%s255 + $0x8] sm:$0xff]
        %v417 = vld [vmem:[%s255 + $0x10] sm:$0xff]
        %v418 = vld [vmem:[%s255 + $0x18] sm:$0xff]
        %420 = vset.pattern.permute.xlu0 0
        %421 = vperm.xlu0 %420, %v415
        %v422 = vpop.permute.xlu0 %421
        %425 = vset.pattern.permute.xlu0 0
        %426 = vperm.xlu0 %425, %v416
        %v427 = vpop.permute.xlu0 %426
        %430 = vset.pattern.permute.xlu0 0
        %431 = vperm.xlu0 %430, %v417
        %v432 = vpop.permute.xlu0 %431
        %435 = vset.pattern.permute.xlu0 0
        %436 = vperm.xlu0 %435, %v418
        %v437 = vpop.permute.xlu0 %436
        %v443 = vunpack.c.l.b16 %v395
        %v444 = vunpack.c.l.b16 %v396
        %v445 = vunpack.c.l.b16 %v397
        %v446 = vunpack.c.l.b16 %v398
        %v447 = vpack.c.b16 %v444, %v443
        %v448 = vpack.c.b16 %v446, %v445
        %v467 = vunpack.c.l.b16 %v399
        %v468 = vunpack.c.l.b16 %v400
        %v469 = vunpack.c.l.b16 %v401
        %v470 = vunpack.c.l.b16 %v402
        %v471 = vunpack.c.l.b16 %v403
        %v472 = vunpack.c.l.b16 %v404
        %v473 = vunpack.c.l.b16 %v405
        %v474 = vunpack.c.l.b16 %v406
        %v475 = vunpack.c.l.b16 %v407
        %v476 = vunpack.c.l.b16 %v408
        %v477 = vunpack.c.l.b16 %v409
        %v478 = vunpack.c.l.b16 %v410
        %v479 = vunpack.c.l.b16 %v411
        %v480 = vunpack.c.l.b16 %v412
        %v481 = vunpack.c.l.b16 %v413
        %v482 = vunpack.c.l.b16 %v414
        %v483 = vpack.c.b16 %v468, %v467
        %v484 = vpack.c.b16 %v470, %v469
        %v485 = vpack.c.b16 %v472, %v471
        %v486 = vpack.c.b16 %v474, %v473
        %v487 = vpack.c.b16 %v476, %v475
        %v488 = vpack.c.b16 %v478, %v477
        %v489 = vpack.c.b16 %v480, %v479
        %v490 = vpack.c.b16 %v482, %v481
        %499 = vmatpush.bf16.msra.mxu0 %v490
        %500 = vmatpush.bf16.msra.mxu0 %v489
        %501 = vmatpush.bf16.msra.mxu0 %v488
        %502 = vmatpush.bf16.msra.mxu0 %v487
        %503 = vmatpush.bf16.msra.mxu0 %v486
        %504 = vmatpush.bf16.msra.mxu0 %v485
        %505 = vmatpush.bf16.msra.mxu0 %v484
        %506 = vmatpush.bf16.msra.mxu0 %v483
        %507 = vmatmul.bf16.gmra.mxu0 %v447
        %v508 = vpop.f32.mrf.mxu0
        %v509 = vadd.f32 %v422, %v508
        %v510 = vpop.f32.mrf.mxu0
        %v511 = vadd.f32 %v427, %v510
        %512 = vmatmul.bf16.gmra.mxu0 %v448
        %v513 = vpop.f32.mrf.mxu0
        %v514 = vadd.f32 %v432, %v513
        %v515 = vpop.f32.mrf.mxu0
        %v516 = vadd.f32 %v437, %v515
        %517 = vdwg.mxu0
        %s518 = smul.u32 %s24, 32
        %s519 = scalar_lea.vmem [#allocation4], %s518
        %v520 = vld [vmem:[%s519] sm:$0xff]
        %v521 = vld [vmem:[%s519 + $0x8] sm:$0xff]
        %v522 = vld [vmem:[%s519 + $0x10] sm:$0xff]
        %v523 = vld [vmem:[%s519 + $0x18] sm:$0xff]
        %v524 = vadd.f32 %v520, %v509
        %v525 = vadd.f32 %v521, %v511
        %v526 = vadd.f32 %v522, %v514
        %v527 = vadd.f32 %v523, %v516
        %528 = vst [vmem:[%s519] sm:$0xff] %v524
        %529 = vst [vmem:[%s519 + $0x8] sm:$0xff] %v525
        %530 = vst [vmem:[%s519 + $0x10] sm:$0xff] %v526
        %531 = vst [vmem:[%s519 + $0x18] sm:$0xff] %v527
        %v532 = vpack.c.bf16 %v509, %v509
        %v533 = vpack.c.bf16 %v511, %v511
        %v534 = vpack.c.bf16 %v514, %v514
        %v535 = vpack.c.bf16 %v516, %v516
        %s536 = smul.u32 %s24, 4
        %s537 = smul.addr %s536, 4
        %s538 = scalar_lea.vmem [#allocation3], %s537
        %539 = vst [vmem:[%s538] sm:$0xf] %v532
        %540 = vst [vmem:[%s538 + $0x4] sm:$0xf] %v533
        %541 = vst [vmem:[%s538 + $0x8] sm:$0xf] %v534
        %542 = vst [vmem:[%s538 + $0xc] sm:$0xf] %v535
        %v543 = vmul.f32 %v524, 0.25
        %v544 = vmul.f32 %v525, 0.25
        %v545 = vmul.f32 %v526, 0.25
        %v546 = vmul.f32 %v527, 0.25
        %547 = vst [vmem:[#allocation8] sm:$0xff] %v543
        %548 = vst [vmem:[#allocation8 + $0x8] sm:$0xff] %v544
        %549 = vst [vmem:[#allocation8 + $0x10] sm:$0xff] %v545
        %550 = vst [vmem:[#allocation8 + $0x18] sm:$0xff] %v546
        // Predicated region
        $region53: #{tpu_custom_call.1} parent=35 // pred_check
          %p551 = pneg %p148
        $region54: #{tpu_custom_call.1} parent=35 // pred_check_branch
          %553 = sbr.rel (%p551) target = $region56
        $region55: #{tpu_custom_call.1} parent=35 // pred_region
          %555 = vsyncadd [#allocation7], 0
          %s556 = smul.addr %s24, 8
          %s557 = scalar_lea.hbm %s4, %s556
          %s558 = sshll.u32 [#allocation8], 4
          %s559 = int_to_ptr.vmem [resolvable:$true] %s558
          %s560 = sshll.u32 %s557, 4
          %s561 = int_to_ptr.hbm [resolvable:$true] %s560
          %566 = dma.vmem_to_hbm [thread:$0]  %s559, 512, %s561, [#allocation7], 128, 128, 8
        $region56: #{tpu_custom_call.1} parent=35 // pred_fallthru
          _
        // Predicated region
        $region57: #{tpu_custom_call.1} parent=35 // pred_check
          %p567 = pneg %p148
        $region58: #{tpu_custom_call.1} parent=35 // pred_check_branch
          %569 = sbr.rel (%p567) target = $region60
        $region59: #{tpu_custom_call.1} parent=35 // pred_region
          %571 = dma.done [#allocation7], 512
        $region60: #{tpu_custom_call.1} parent=35 // pred_fallthru
          _
      $region36: #{tpu_custom_call.1} parent=5 // pred_fallthru
        _
      %p572 = scmp.le.s32.totalorder 2, %s14
      // Predicated region
      $region61: #{tpu_custom_call.1} parent=5 // pred_check
        %p573 = pneg %p572
      $region62: #{tpu_custom_call.1} parent=5 // pred_check_branch
        %575 = sbr.rel (%p573) target = $region64
      $region63: #{tpu_custom_call.1} parent=5 // pred_region
        %s576 = ssub.s32 %s14, 2
      $region64: #{tpu_custom_call.1} parent=5 // pred_fallthru
        _
    $region6: #{tpu_custom_call.1} parent=1 // loop_footer
      %s18 = sadd.s32 1, %s14
    $region7: #{tpu_custom_call.1} parent=1 // loop_footer_branch
      %13 = sbr.rel target = $region3
    $region8: #{tpu_custom_call.1} parent=1 // loop_exit
      _
    %577 = vsyncpa [#allocation6], 1
    %s578 = scalar_lea.sflag [#allocation6], 1
    %579 = vsyncpa %s578, 1
    %580 = vsyncpa [#allocation7], 1
    %s581 = scalar_lea.sflag [#allocation7], 1
    %582 = vsyncpa %s581, 1

</llo_original>
